<compile_context>
chip_gen: v5e
topology: v5e:2x2
jax: 0.10.0
libtpu: 0.0.40
codegen_flags: <defaults>
</compile_context>

<pallas_src>
import functools

import jax
import jax.numpy as jnp
from jax.experimental import pallas as pl
from jax.experimental.pallas import tpu as pltpu


# ---------------------------------------------------------------------------
# Helpers
# ---------------------------------------------------------------------------
_MIB = 1 << 20
_VMEM_BUDGET = 40 * _MIB       # target working-set used for tile planning
_VMEM_LIMIT_FLOOR = 32 * _MIB  # never request less than the common default
_VMEM_LIMIT_CAP = 64 * _MIB    # never request more than v7x physical VMEM


def _gelu_tanh(x):
    # tanh-approx GELU: stays on VPU/EUP, no erf lowering needed.
    c = 0.7978845608028654  # sqrt(2/pi)
    return 0.5 * x * (1.0 + jnp.tanh(c * (x + 0.044715 * x * x * x)))


def _round_up(x, m):
    return ((x + m - 1) // m) * m


def _pick_tile(dim_pad, tile_max):
    """Largest multiple of 128 that divides dim_pad and is <= tile_max."""
    tile_max = max(128, min(tile_max, dim_pad))
    best, t = 128, 128
    while t <= tile_max:
        if dim_pad % t == 0:
            best = t
        t += 128
    return best


def _layer_vmem_bytes(tm, d, th):
    """Per-step VMEM footprint of the fused layer-stack kernel."""
    x_in = 2 * tm * d * 4          # double-buffered f32 input block
    out = 2 * tm * d * 2           # double-buffered bf16 output block
    w1 = 2 * d * th * 2            # double-buffered bf16 weight slices
    w2 = 2 * th * d * 2
    b1 = 2 * th * 4
    b2 = 2 * d * 4
    scratch = 2 * tm * d * 4       # x_acc + y_acc (f32)
    interm = tm * th * 4           # (tm, th) f32 GELU intermediate
    return x_in + out + w1 + w2 + b1 + b2 + scratch + interm


def _proj_vmem_bytes(tm, d, tn):
    """Per-step VMEM footprint of the final-projection kernel."""
    x_in = 2 * tm * d * 2          # bf16 activations
    w = 2 * d * tn * 2             # bf16 vocab-weight slice
    b = 2 * tn * 4
    out = 2 * tm * tn * 4          # f32 logits tile
    return x_in + w + b + out


def _vmem_limit(nbytes):
    return int(min(_VMEM_LIMIT_CAP,
                   max(_VMEM_LIMIT_FLOOR, int(nbytes * 1.2) + 2 * _MIB)))


# ---------------------------------------------------------------------------
# Kernels
# ---------------------------------------------------------------------------
def stacked_layers_kernel(x_ref, w1_ref, b1_ref, w2_ref, b2_ref, o_ref,
                          x_acc, y_acc):
    """All decoder layers for one token tile.

    Grid = (token_tiles, L, H_tiles).  x_acc carries the running activation
    (f32) across the layer axis; y_acc accumulates the second matmul across
    the H axis.  The residual add is fused.

    x_ref : (TM, D) f32      w1_ref: (D, TH) bf16   b1_ref: (1, TH) f32
    w2_ref: (TH, D) bf16     b2_ref: (1, D)  f32    o_ref : (TM, D) bf16
    """
    l = pl.program_id(1)
    k = pl.program_id(2)
    nl = pl.num_programs(1)
    nk = pl.num_programs(2)

    @pl.when((l == 0) & (k == 0))
    def _():
        x_acc[...] = x_ref[...]

    @pl.when(k == 0)
    def _():
        y_acc[...] = jnp.zeros_like(y_acc)

    x = x_acc[...]
    # Linear1 slice (bf16 MXU, f32 accumulate) + bias + GELU in f32.
    h = jnp.dot(x.astype(jnp.bfloat16), w1_ref[...],
                preferred_element_type=jnp.float32) + b1_ref[...]
    h = _gelu_tanh(h)
    # Linear2 slice, accumulated over the H axis in f32.
    y_acc[...] += jnp.dot(h.astype(jnp.bfloat16), w2_ref[...],
                          preferred_element_type=jnp.float32)

    # End of layer: fused residual + bias epilogue.
    @pl.when(k == nk - 1)
    def _():
        x_acc[...] = x_acc[...] + y_acc[...] + b2_ref[...]

    # End of stack: single bf16 HBM writeback of the activation.
    @pl.when((k == nk - 1) & (l == nl - 1))
    def _():
        o_ref[...] = x_acc[...].astype(o_ref.dtype)


def final_projection_kernel(x_ref, w_ref, b_ref, o_ref):
    """logits tile = x @ Wf + bf.

    x_ref: (TM, D) bf16, w_ref: (D, TN) bf16, b_ref: (1, TN) f32,
    o_ref: (TM, TN) f32.  Vocab axis is tiled (TN multiple of 128).
    """
    o_ref[...] = (
        jnp.dot(x_ref[...], w_ref[...], preferred_element_type=jnp.float32)
        + b_ref[...]
    )


# ---------------------------------------------------------------------------
# pallas_call wrappers
# ---------------------------------------------------------------------------
def _run_layers(x2d, w1s, b1s, w2s, b2s, *, tm, th):
    n_tok, d = x2d.shape
    num_layers, _, h = w1s.shape
    grid = (n_tok // tm, num_layers, h // th)

    weight_bytes = num_layers * (2 * d * h * 2 + (h + d) * 4)
    cost = pl.CostEstimate(
        flops=4 * n_tok * d * h * num_layers,
        transcendentals=n_tok * h * num_layers,
        bytes_accessed=(n_tok * d * 4 + n_tok * d * 2
                        + (n_tok // tm) * weight_bytes),
    )

    return pl.pallas_call(
        stacked_layers_kernel,
        out_shape=jax.ShapeDtypeStruct((n_tok, d), jnp.bfloat16),
        grid_spec=pltpu.PrefetchScalarGridSpec(
            num_scalar_prefetch=0,
            grid=grid,
            in_specs=[
                pl.BlockSpec((tm, d), lambda i, l, k: (i, 0)),
                pl.BlockSpec((None, d, th), lambda i, l, k: (l, 0, k)),
                pl.BlockSpec((None, 1, th), lambda i, l, k: (l, 0, k)),
                pl.BlockSpec((None, th, d), lambda i, l, k: (l, k, 0)),
                pl.BlockSpec((None, 1, d), lambda i, l, k: (l, 0, 0)),
            ],
            out_specs=pl.BlockSpec((tm, d), lambda i, l, k: (i, 0)),
            scratch_shapes=[pltpu.VMEM((tm, d), jnp.float32),   # x_acc
                            pltpu.VMEM((tm, d), jnp.float32)],  # y_acc
        ),
        compiler_params=pltpu.CompilerParams(
            dimension_semantics=("parallel", "arbitrary", "arbitrary"),
            vmem_limit_bytes=_vmem_limit(_layer_vmem_bytes(tm, d, th)),
        ),
        cost_estimate=cost,
    )(x2d, w1s, b1s, w2s, b2s)


def _final_projection(x2d, wf, bf, *, tm, tn):
    n_tok, d = x2d.shape
    v = wf.shape[1]
    n_i, n_j = n_tok // tm, v // tn

    x_bytes = n_tok * d * x2d.dtype.itemsize
    wf_bytes = d * v * wf.dtype.itemsize
    # Token-outer re-streams wf (n_i) times; vocab-outer re-streams x (n_j)
    # times.  Pick whichever wastes fewer HBM bytes.
    vocab_outer = wf_bytes * (n_i - 1) > x_bytes * (n_j - 1)

    if vocab_outer:
        grid = (n_j, n_i)
        x_spec = pl.BlockSpec((tm, d), lambda j, i: (i, 0))
        w_spec = pl.BlockSpec((d, tn), lambda j, i: (0, j))
        b_spec = pl.BlockSpec((1, tn), lambda j, i: (0, j))
        o_spec = pl.BlockSpec((tm, tn), lambda j, i: (i, j))
        bytes_accessed = wf_bytes + n_j * x_bytes + v * 4 + n_tok * v * 4
    else:
        grid = (n_i, n_j)
        x_spec = pl.BlockSpec((tm, d), lambda i, j: (i, 0))
        w_spec = pl.BlockSpec((d, tn), lambda i, j: (0, j))
        b_spec = pl.BlockSpec((1, tn), lambda i, j: (0, j))
        o_spec = pl.BlockSpec((tm, tn), lambda i, j: (i, j))
        bytes_accessed = n_i * wf_bytes + x_bytes + v * 4 + n_tok * v * 4

    return pl.pallas_call(
        final_projection_kernel,
        out_shape=jax.ShapeDtypeStruct((n_tok, v), jnp.float32),
        grid_spec=pltpu.PrefetchScalarGridSpec(
            num_scalar_prefetch=0,
            grid=grid,
            in_specs=[x_spec, w_spec, b_spec],
            out_specs=o_spec,
        ),
        compiler_params=pltpu.CompilerParams(
            dimension_semantics=("parallel", "parallel"),
            vmem_limit_bytes=_vmem_limit(_proj_vmem_bytes(tm, d, tn)),
        ),
        cost_estimate=pl.CostEstimate(
            flops=2 * n_tok * d * v,
            transcendentals=0,
            bytes_accessed=bytes_accessed,
        ),
    )(x2d, wf, bf)


@functools.partial(jax.jit,
                   static_argnames=("vocab_size", "tm", "th_max", "tn_max"))
def decoder_forward(E, kparams, *, vocab_size, tm=512, th_max=2048,
                    tn_max=1024):
    """E: (B, S, D) -> logits (B, S, vocab_size).  kparams from prepare_params."""
    b, s, d = E.shape
    n_tok = b * s
    d_pad = kparams["w1"].shape[1]
    h_pad = kparams["w1"].shape[2]
    v_pad = kparams["wf"].shape[1]

    x = E.reshape(n_tok, d).astype(jnp.float32)
    if d_pad != d:
        x = jnp.pad(x, ((0, 0), (0, d_pad - d)))

    # Token tile: big for MXU utilization / arithmetic intensity, shrunk only
    # if the fixed per-tile VMEM footprint would not fit the budget.
    tm_eff = min(tm, _round_up(n_tok, 8))
    while tm_eff > 8 and _layer_vmem_bytes(tm_eff, d_pad, 128) > _VMEM_BUDGET:
        tm_eff = _round_up(max(tm_eff // 2, 8), 8)
    n_pad = _round_up(n_tok, tm_eff)
    if n_pad != n_tok:
        x = jnp.pad(x, ((0, n_pad - n_tok), (0, 0)))

    # H tile: as large as the VMEM budget allows (keeps weight blocks and the
    # (tm, th) GELU intermediate bounded on v7x's 64 MiB VMEM).
    th_cap = max(128, min(th_max, h_pad))
    while th_cap > 128 and _layer_vmem_bytes(tm_eff, d_pad, th_cap) > _VMEM_BUDGET:
        th_cap -= 128
    th = _pick_tile(h_pad, th_cap)

    x = _run_layers(x, kparams["w1"], kparams["b1"], kparams["w2"],
                    kparams["b2"], tm=tm_eff, th=th)

    # Vocab tile: lane-dense multiple of 128, within VMEM budget.
    tn_cap = max(128, min(tn_max, v_pad))
    while tn_cap > 128 and _proj_vmem_bytes(tm_eff, d_pad, tn_cap) > _VMEM_BUDGET:
        tn_cap -= 128
    tn = _pick_tile(v_pad, tn_cap)

    logits = _final_projection(x, kparams["wf"], kparams["bf"],
                               tm=tm_eff, tn=tn)
    return logits[:n_tok, :vocab_size].reshape(b, s, vocab_size)


# ---------------------------------------------------------------------------
# Parameters
# ---------------------------------------------------------------------------
def init_params(key, vocab_size, decoder_layers, embed_dim, mlp_hidden_dim):
    """Float32 parameters at true shapes, weights pre-transposed to (in, out)."""
    scale = 0.02
    w1s, b1s, w2s, b2s = [], [], [], []
    for _ in range(decoder_layers):
        key, k1, k2, k3, k4 = jax.random.split(key, 5)
        w1s.append(scale * jax.random.normal(k1, (embed_dim, mlp_hidden_dim), jnp.float32))
        b1s.append(scale * jax.random.normal(k2, (1, mlp_hidden_dim), jnp.float32))
        w2s.append(scale * jax.random.normal(k3, (mlp_hidden_dim, embed_dim), jnp.float32))
        b2s.append(scale * jax.random.normal(k4, (1, embed_dim), jnp.float32))
    key, kf, kb = jax.random.split(key, 3)
    # NOTE: `text_projection` exists in __init__ but is never used in forward;
    # it is intentionally omitted here.
    return {
        "w1": jnp.stack(w1s),                               # (L, D, H)
        "b1": jnp.stack(b1s),                               # (L, 1, H)
        "w2": jnp.stack(w2s),                               # (L, H, D)
        "b2": jnp.stack(b2s),                               # (L, 1, D)
        "wf": scale * jax.random.normal(kf, (embed_dim, vocab_size), jnp.float32),
        "bf": scale * jax.random.normal(kb, (1, vocab_size), jnp.float32),
    }


def prepare_params(params):
    """Zero-pad D/H/V to multiples of 128 (exact) and cast weights to bf16
    once, outside the jitted forward.  Biases stay f32."""
    w1, b1, w2, b2, wf, bf = (params[k] for k in
                              ("w1", "b1", "w2", "b2", "wf", "bf"))
    _, d, h = w1.shape
    v = wf.shape[1]
    pd = _round_up(d, 128) - d
    ph = _round_up(h, 128) - h
    pv = _round_up(v, 128) - v
    return {
        "w1": jnp.pad(w1, ((0, 0), (0, pd), (0, ph))).astype(jnp.bfloat16),
        "b1": jnp.pad(b1, ((0, 0), (0, 0), (0, ph))),
        "w2": jnp.pad(w2, ((0, 0), (0, ph), (0, pd))).astype(jnp.bfloat16),
        "b2": jnp.pad(b2, ((0, 0), (0, 0), (0, pd))),
        "wf": jnp.pad(wf, ((0, pd), (0, pv))).astype(jnp.bfloat16),
        "bf": jnp.pad(bf, ((0, 0), (0, pv))),
    }


# ---------------------------------------------------------------------------
# Reference (pure JAX, mirrors kernel numerics: bf16 matmul inputs, f32 accum)
# ---------------------------------------------------------------------------
def decoder_forward_ref(E, params):
    b, s, d = E.shape
    x = E.reshape(b * s, d).astype(jnp.float32)
    num_layers = params["w1"].shape[0]
    for l in range(num_layers):
        h = jnp.dot(x.astype(jnp.bfloat16),
                    params["w1"][l].astype(jnp.bfloat16),
                    preferred_element_type=jnp.float32) + params["b1"][l]
        h = _gelu_tanh(h)
        x = x + jnp.dot(h.astype(jnp.bfloat16),
                        params["w2"][l].astype(jnp.bfloat16),
                        preferred_element_type=jnp.float32) + params["b2"][l]
    logits = jnp.dot(x.astype(jnp.bfloat16),
                     params["wf"].astype(jnp.bfloat16),
                     preferred_element_type=jnp.float32) + params["bf"]
    return logits.reshape(b, s, -1)


if __name__ == "__main__":
    # Small shapes consistent with the module's forward.
    batch, seq, embed_dim = 2, 8, 32
    mlp_hidden_dim, vocab_size, decoder_layers = 64, 128, 2

    key = jax.random.PRNGKey(0)
    key, kE = jax.random.split(key)
    E = jax.random.normal(kE, (batch, seq, embed_dim), jnp.float32)
    params = init_params(key, vocab_size, decoder_layers, embed_dim,
                         mlp_hidden_dim)
    kparams = prepare_params(params)

    logits = decoder_forward(E, kparams, vocab_size=vocab_size)
    jax.block_until_ready(logits)
    assert logits.shape == (batch, seq, vocab_size), logits.shape

    ref = decoder_forward_ref(E, params)
    max_err = float(jnp.max(jnp.abs(logits - ref)))
    assert jnp.allclose(logits, ref, atol=2e-3, rtol=2e-3), max_err

    print("KERNEL_OK")
</pallas_src>

<mosaic_0001>
module attributes {stable_mosaic.version = 11 : i64} {
  func.func @final_projection_kernel(%arg0: i32, %arg1: i32, %arg2: memref<16x128xbf16, #tpu.memory_space<vmem>>, %arg3: memref<128x128xbf16, #tpu.memory_space<vmem>>, %arg4: memref<1x128xf32, #tpu.memory_space<vmem>>, %arg5: memref<16x128xf32, #tpu.memory_space<vmem>>) attributes {dimension_semantics = [#tpu.dimension_semantics<parallel>, #tpu.dimension_semantics<parallel>], iteration_bounds = array<i64: 1, 1>, scalar_prefetch = 0 : i64, scratch_operands = 0 : i64, tpu.core_type = #tpu.core_type<tc>, window_params = [{transform_indices = @transform_0, window_bounds = array<i64: 16, 128>}, {transform_indices = @transform_1, window_bounds = array<i64: 128, 128>}, {transform_indices = @transform_2, window_bounds = array<i64: 1, 128>}, {transform_indices = @transform_3, window_bounds = array<i64: 16, 128>}]} {
    %c0 = arith.constant 0 : index
    %c0_0 = arith.constant 0 : index
    %0 = vector.load %arg2[%c0, %c0_0] : memref<16x128xbf16, #tpu.memory_space<vmem>>, vector<16x128xbf16>
    %c0_1 = arith.constant 0 : index
    %c0_2 = arith.constant 0 : index
    %1 = vector.load %arg3[%c0_1, %c0_2] : memref<128x128xbf16, #tpu.memory_space<vmem>>, vector<128x128xbf16>
    %cst = arith.constant dense<0.000000e+00> : vector<16x128xf32>
    %2 = tpu.matmul %0, %1, %cst {dimension_numbers = #tpu.dot_dimension_numbers<[1], [0], [0], [1], [0, 0, 1, 1], [], []>} : vector<16x128xbf16>, vector<128x128xbf16>, vector<16x128xf32> -> vector<16x128xf32>
    %c0_3 = arith.constant 0 : index
    %c0_4 = arith.constant 0 : index
    %3 = vector.load %arg4[%c0_3, %c0_4] : memref<1x128xf32, #tpu.memory_space<vmem>>, vector<1x128xf32>
    %4 = vector.broadcast %3 : vector<1x128xf32> to vector<16x128xf32>
    %5 = arith.addf %2, %4 : vector<16x128xf32>
    %c0_5 = arith.constant 0 : index
    %c0_6 = arith.constant 0 : index
    %6 = vector.load %arg5[%c0_5, %c0_6] : memref<16x128xf32, #tpu.memory_space<vmem>>, vector<16x128xf32>
    tpu.vector_store %arg5[%c0_5, %c0_6], %5 {strides = array<i32>} : memref<16x128xf32, #tpu.memory_space<vmem>>, vector<16x128xf32>,
    return
  }
  func.func @transform_0(%arg0: i32, %arg1: i32) -> (i32, i32) {
    %c0_i32 = arith.constant 0 : i32
    %c0_i32_0 = arith.constant 0 : i32
    return %arg0, %c0_i32 : i32, i32
  }
  func.func @transform_1(%arg0: i32, %arg1: i32) -> (i32, i32) {
    %c0_i32 = arith.constant 0 : i32
    %c0_i32_0 = arith.constant 0 : i32
    return %c0_i32, %arg1 : i32, i32
  }
  func.func @transform_2(%arg0: i32, %arg1: i32) -> (i32, i32) {
    %c0_i32 = arith.constant 0 : i32
    %c0_i32_0 = arith.constant 0 : i32
    return %c0_i32, %arg1 : i32, i32
  }
  func.func @transform_3(%arg0: i32, %arg1: i32) -> (i32, i32) {
    %c0_i32 = arith.constant 0 : i32
    return %arg0, %arg1 : i32, i32
  }
}

module attributes {stable_mosaic.version = 11 : i64} {
  func.func @stacked_layers_kernel(%arg0: i32, %arg1: i32, %arg2: i32, %arg3: memref<16x128xf32, #tpu.memory_space<vmem>>, %arg4: memref<1x128x128xbf16, #tpu.memory_space<vmem>>, %arg5: memref<1x1x128xf32, #tpu.memory_space<vmem>>, %arg6: memref<1x128x128xbf16, #tpu.memory_space<vmem>>, %arg7: memref<1x1x128xf32, #tpu.memory_space<vmem>>, %arg8: memref<16x128xbf16, #tpu.memory_space<vmem>>, %arg9: memref<16x128xf32, #tpu.memory_space<vmem>>, %arg10: memref<16x128xf32, #tpu.memory_space<vmem>>) attributes {dimension_semantics = [#tpu.dimension_semantics<parallel>, #tpu.dimension_semantics<arbitrary>, #tpu.dimension_semantics<arbitrary>], iteration_bounds = array<i64: 1, 2, 1>, scalar_prefetch = 0 : i64, scratch_operands = 2 : i64, tpu.core_type = #tpu.core_type<tc>, window_params = [{transform_indices = @transform_0, window_bounds = array<i64: 16, 128>}, {transform_indices = @transform_1, window_bounds = array<i64: 1, 128, 128>}, {transform_indices = @transform_2, window_bounds = array<i64: 1, 1, 128>}, {transform_indices = @transform_3, window_bounds = array<i64: 1, 128, 128>}, {transform_indices = @transform_4, window_bounds = array<i64: 1, 1, 128>}, {transform_indices = @transform_5, window_bounds = array<i64: 16, 128>}]} {
    %c0_i32 = arith.constant 0 : i32
    %0 = arith.cmpi eq, %arg1, %c0_i32 : i32
    %c0_i32_0 = arith.constant 0 : i32
    %1 = arith.cmpi eq, %arg2, %c0_i32_0 : i32
    %2 = arith.andi %0, %1 : i1
    %3 = arith.extui %2 : i1 to i32
    %c0_i32_1 = arith.constant 0 : i32
    %4 = arith.cmpi ne, %3, %c0_i32_1 : i32
    scf.if %4 {
      %c0_27 = arith.constant 0 : index
      %c0_28 = arith.constant 0 : index
      %45 = vector.load %arg3[%c0_27, %c0_28] : memref<16x128xf32, #tpu.memory_space<vmem>>, vector<16x128xf32>
      %c0_29 = arith.constant 0 : index
      %c0_30 = arith.constant 0 : index
      %46 = vector.load %arg9[%c0_29, %c0_30] : memref<16x128xf32, #tpu.memory_space<vmem>>, vector<16x128xf32>
      tpu.vector_store %arg9[%c0_29, %c0_30], %45 {strides = array<i32>} : memref<16x128xf32, #tpu.memory_space<vmem>>, vector<16x128xf32>,
    } else {
    }
    %c0_i32_2 = arith.constant 0 : i32
    %5 = arith.cmpi eq, %arg2, %c0_i32_2 : i32
    %6 = arith.extui %5 : i1 to i32
    %c0_i32_3 = arith.constant 0 : i32
    %7 = arith.cmpi ne, %6, %c0_i32_3 : i32
    scf.if %7 {
      %cst_27 = arith.constant 0.000000e+00 : f32
      %45 = vector.broadcast %cst_27 : f32 to vector<16x128xf32>
      %c0_28 = arith.constant 0 : index
      %c0_29 = arith.constant 0 : index
      %46 = vector.load %arg10[%c0_28, %c0_29] : memref<16x128xf32, #tpu.memory_space<vmem>>, vector<16x128xf32>
      tpu.vector_store %arg10[%c0_28, %c0_29], %45 {strides = array<i32>} : memref<16x128xf32, #tpu.memory_space<vmem>>, vector<16x128xf32>,
    } else {
    }
    %c0 = arith.constant 0 : index
    %c0_4 = arith.constant 0 : index
    %8 = vector.load %arg9[%c0, %c0_4] : memref<16x128xf32, #tpu.memory_space<vmem>>, vector<16x128xf32>
    %9 = arith.truncf %8 : vector<16x128xf32> to vector<16x128xbf16>
    %c0_5 = arith.constant 0 : index
    %c0_6 = arith.constant 0 : index
    %c0_7 = arith.constant 0 : index
    %10 = vector.load %arg4[%c0_5, %c0_6, %c0_7] : memref<1x128x128xbf16, #tpu.memory_space<vmem>>, vector<1x128x128xbf16>
    %11 = vector.shape_cast %10 : vector<1x128x128xbf16> to vector<128x128xbf16>
    %cst = arith.constant dense<0.000000e+00> : vector<16x128xf32>
    %12 = tpu.matmul %9, %11, %cst {dimension_numbers = #tpu.dot_dimension_numbers<[1], [0], [0], [1], [0, 0, 1, 1], [], []>} : vector<16x128xbf16>, vector<128x128xbf16>, vector<16x128xf32> -> vector<16x128xf32>
    %c0_8 = arith.constant 0 : index
    %c0_9 = arith.constant 0 : index
    %c0_10 = arith.constant 0 : index
    %13 = vector.load %arg5[%c0_8, %c0_9, %c0_10] : memref<1x1x128xf32, #tpu.memory_space<vmem>>, vector<1x1x128xf32>
    %14 = vector.shape_cast %13 : vector<1x1x128xf32> to vector<1x128xf32>
    %15 = vector.broadcast %14 : vector<1x128xf32> to vector<16x128xf32>
    %16 = arith.addf %12, %15 : vector<16x128xf32>
    %cst_11 = arith.constant 5.000000e-01 : f32
    %17 = vector.broadcast %cst_11 : f32 to vector<16x128xf32>
    %18 = arith.mulf %17, %16 : vector<16x128xf32>
    %cst_12 = arith.constant 4.471500e-02 : f32
    %19 = vector.broadcast %cst_12 : f32 to vector<16x128xf32>
    %20 = arith.mulf %19, %16 : vector<16x128xf32>
    %21 = arith.mulf %20, %16 : vector<16x128xf32>
    %22 = arith.mulf %21, %16 : vector<16x128xf32>
    %23 = arith.addf %16, %22 : vector<16x128xf32>
    %cst_13 = arith.constant 0.797884583 : f32
    %24 = vector.broadcast %cst_13 : f32 to vector<16x128xf32>
    %25 = arith.mulf %24, %23 : vector<16x128xf32>
    %26 = math.tanh %25 : vector<16x128xf32>
    %cst_14 = arith.constant 1.000000e+00 : f32
    %27 = vector.broadcast %cst_14 : f32 to vector<16x128xf32>
    %28 = arith.addf %27, %26 : vector<16x128xf32>
    %29 = arith.mulf %18, %28 : vector<16x128xf32>
    %c0_15 = arith.constant 0 : index
    %c0_16 = arith.constant 0 : index
    %30 = vector.load %arg10[%c0_15, %c0_16] : memref<16x128xf32, #tpu.memory_space<vmem>>, vector<16x128xf32>
    %31 = arith.truncf %29 : vector<16x128xf32> to vector<16x128xbf16>
    %c0_17 = arith.constant 0 : index
    %c0_18 = arith.constant 0 : index
    %c0_19 = arith.constant 0 : index
    %32 = vector.load %arg6[%c0_17, %c0_18, %c0_19] : memref<1x128x128xbf16, #tpu.memory_space<vmem>>, vector<1x128x128xbf16>
    %33 = vector.shape_cast %32 : vector<1x128x128xbf16> to vector<128x128xbf16>
    %cst_20 = arith.constant dense<0.000000e+00> : vector<16x128xf32>
    %34 = tpu.matmul %31, %33, %cst_20 {dimension_numbers = #tpu.dot_dimension_numbers<[1], [0], [0], [1], [0, 0, 1, 1], [], []>} : vector<16x128xbf16>, vector<128x128xbf16>, vector<16x128xf32> -> vector<16x128xf32>
    %35 = arith.addf %30, %34 : vector<16x128xf32>
    %c0_21 = arith.constant 0 : index
    %c0_22 = arith.constant 0 : index
    %36 = vector.load %arg10[%c0_21, %c0_22] : memref<16x128xf32, #tpu.memory_space<vmem>>, vector<16x128xf32>
    tpu.vector_store %arg10[%c0_21, %c0_22], %35 {strides = array<i32>} : memref<16x128xf32, #tpu.memory_space<vmem>>, vector<16x128xf32>,
    %c0_i32_23 = arith.constant 0 : i32
    %37 = arith.cmpi eq, %arg2, %c0_i32_23 : i32
    %38 = arith.extui %37 : i1 to i32
    %c0_i32_24 = arith.constant 0 : i32
    %39 = arith.cmpi ne, %38, %c0_i32_24 : i32
    scf.if %39 {
      %c0_27 = arith.constant 0 : index
      %c0_28 = arith.constant 0 : index
      %45 = vector.load %arg9[%c0_27, %c0_28] : memref<16x128xf32, #tpu.memory_space<vmem>>, vector<16x128xf32>
      %c0_29 = arith.constant 0 : index
      %c0_30 = arith.constant 0 : index
      %46 = vector.load %arg10[%c0_29, %c0_30] : memref<16x128xf32, #tpu.memory_space<vmem>>, vector<16x128xf32>
      %47 = arith.addf %45, %46 : vector<16x128xf32>
      %c0_31 = arith.constant 0 : index
      %c0_32 = arith.constant 0 : index
      %c0_33 = arith.constant 0 : index
      %48 = vector.load %arg7[%c0_31, %c0_32, %c0_33] : memref<1x1x128xf32, #tpu.memory_space<vmem>>, vector<1x1x128xf32>
      %49 = vector.shape_cast %48 : vector<1x1x128xf32> to vector<1x128xf32>
      %50 = vector.broadcast %49 : vector<1x128xf32> to vector<16x128xf32>
      %51 = arith.addf %47, %50 : vector<16x128xf32>
      %c0_34 = arith.constant 0 : index
      %c0_35 = arith.constant 0 : index
      %52 = vector.load %arg9[%c0_34, %c0_35] : memref<16x128xf32, #tpu.memory_space<vmem>>, vector<16x128xf32>
      tpu.vector_store %arg9[%c0_34, %c0_35], %51 {strides = array<i32>} : memref<16x128xf32, #tpu.memory_space<vmem>>, vector<16x128xf32>,
    } else {
    }
    %c0_i32_25 = arith.constant 0 : i32
    %40 = arith.cmpi eq, %arg2, %c0_i32_25 : i32
    %c1_i32 = arith.constant 1 : i32
    %41 = arith.cmpi eq, %arg1, %c1_i32 : i32
    %42 = arith.andi %40, %41 : i1
    %43 = arith.extui %42 : i1 to i32
    %c0_i32_26 = arith.constant 0 : i32
    %44 = arith.cmpi ne, %43, %c0_i32_26 : i32
    scf.if %44 {
      %c0_27 = arith.constant 0 : index
      %c0_28 = arith.constant 0 : index
      %45 = vector.load %arg9[%c0_27, %c0_28] : memref<16x128xf32, #tpu.memory_space<vmem>>, vector<16x128xf32>
      %46 = arith.truncf %45 : vector<16x128xf32> to vector<16x128xbf16>
      %c0_29 = arith.constant 0 : index
      %c0_30 = arith.constant 0 : index
      %47 = vector.load %arg8[%c0_29, %c0_30] : memref<16x128xbf16, #tpu.memory_space<vmem>>, vector<16x128xbf16>
      tpu.vector_store %arg8[%c0_29, %c0_30], %46 {strides = array<i32>} : memref<16x128xbf16, #tpu.memory_space<vmem>>, vector<16x128xbf16>,
    } else {
    }
    return
  }
  func.func @transform_0(%arg0: i32, %arg1: i32, %arg2: i32) -> (i32, i32) {
    %c0_i32 = arith.constant 0 : i32
    %c0_i32_0 = arith.constant 0 : i32
    return %arg0, %c0_i32 : i32, i32
  }
  func.func @transform_1(%arg0: i32, %arg1: i32, %arg2: i32) -> (i32, i32, i32) {
    %c0_i32 = arith.constant 0 : i32
    %c0_i32_0 = arith.constant 0 : i32
    return %arg1, %c0_i32, %arg2 : i32, i32, i32
  }
  func.func @transform_2(%arg0: i32, %arg1: i32, %arg2: i32) -> (i32, i32, i32) {
    %c0_i32 = arith.constant 0 : i32
    %c0_i32_0 = arith.constant 0 : i32
    return %arg1, %c0_i32, %arg2 : i32, i32, i32
  }
  func.func @transform_3(%arg0: i32, %arg1: i32, %arg2: i32) -> (i32, i32, i32) {
    %c0_i32 = arith.constant 0 : i32
    %c0_i32_0 = arith.constant 0 : i32
    return %arg1, %arg2, %c0_i32 : i32, i32, i32
  }
  func.func @transform_4(%arg0: i32, %arg1: i32, %arg2: i32) -> (i32, i32, i32) {
    %c0_i32 = arith.constant 0 : i32
    %c0_i32_0 = arith.constant 0 : i32
    %c0_i32_1 = arith.constant 0 : i32
    return %arg1, %c0_i32, %c0_i32_0 : i32, i32, i32
  }
  func.func @transform_5(%arg0: i32, %arg1: i32, %arg2: i32) -> (i32, i32) {
    %c0_i32 = arith.constant 0 : i32
    %c0_i32_0 = arith.constant 0 : i32
    return %arg0, %c0_i32 : i32, i32
  }
}

</mosaic_0001>

<llo_original>
// kernel: decoder_forward.3
$region0: #{decoder_forward.3}
  #allocation0 [shape = 'u32[]', space=smem, size = 0x4, offset = 0x4, fixed_abs, tag = 'smem constant byte address 0x4 - core index']
  #allocation1 [shape = 'u32[72,128]{1,0:T(1,128)}', space=vmem, size = 0x9000, scoped, tag = 'internal scratch']
  %s0 = inlined_call_operand.vmem [shape: bf16[16,128], index: 0, kind: input, shape index: {}]
  %s1 = inlined_call_operand.vmem [shape: bf16[128,128], index: 1, kind: input, shape index: {}]
  %s2 = inlined_call_operand.vmem [shape: f32[1,128], index: 2, kind: input, shape index: {}]
  %s3 = inlined_call_operand.hbm [shape: f32[16,128], index: 3, kind: output, shape index: {}]
  %s4 = sld [smem:[#allocation0]]
  $region22: #{decoder_forward.3} parent=0
    _
  %s6 = ssub.s32 1, %s4
  %s7 = scalar_select 0, %s6, %s4
  $region1: #{decoder_forward.3} parent=0
    #allocation2 [shape = 'u8[8192]{0}', space=vmem, size = 0x2000, scoped, tag = 'output window, operand 0, single buffered']
    #allocation3 [shape = 's32[1]{0}', space=sflag, size = 0x4, scoped, tag = 'scoped memory for decoder_forward.3']
    %8 = vsyncpa [#allocation3], 0
    // Predicated region
    $region2: #{decoder_forward.3} parent=1 // pred_check
      _
    $region3: #{decoder_forward.3} parent=1 // pred_check_branch
      %10 = sbr.rel (0) target = $region5
    $region4: #{decoder_forward.3} parent=1 // pred_region
      _
    $region5: #{decoder_forward.3} parent=1 // pred_fallthru
      _
    // Predicated region
    $region6: #{decoder_forward.3} parent=1 // pred_check
      _
    $region7: #{decoder_forward.3} parent=1 // pred_check_branch
      %12 = sbr.rel (0) target = $region9
    $region8: #{decoder_forward.3} parent=1 // pred_region
      _
    $region9: #{decoder_forward.3} parent=1 // pred_fallthru
      _
    // Predicated region
    $region10: #{decoder_forward.3} parent=1 // pred_check
      _
    $region11: #{decoder_forward.3} parent=1 // pred_check_branch
      %14 = sbr.rel (0) target = $region13
    $region12: #{decoder_forward.3} parent=1 // pred_region
      _
    $region13: #{decoder_forward.3} parent=1 // pred_fallthru
      _
    %v15 = vld [vmem:[%s0] sm:$0xf]
    %v16 = vld [vmem:[%s0 + $0x4] sm:$0xf]
    %v17 = vld [vmem:[%s1] sm:$0xf]
    %v18 = vld [vmem:[%s1 + $0x4] sm:$0xf]
    %v19 = vld [vmem:[%s1 + $0x8] sm:$0xf]
    %v20 = vld [vmem:[%s1 + $0xc] sm:$0xf]
    %v21 = vld [vmem:[%s1 + $0x10] sm:$0xf]
    %v22 = vld [vmem:[%s1 + $0x14] sm:$0xf]
    %v23 = vld [vmem:[%s1 + $0x18] sm:$0xf]
    %v24 = vld [vmem:[%s1 + $0x1c] sm:$0xf]
    %v25 = vld [vmem:[%s1 + $0x20] sm:$0xf]
    %v26 = vld [vmem:[%s1 + $0x24] sm:$0xf]
    %v27 = vld [vmem:[%s1 + $0x28] sm:$0xf]
    %v28 = vld [vmem:[%s1 + $0x2c] sm:$0xf]
    %v29 = vld [vmem:[%s1 + $0x30] sm:$0xf]
    %v30 = vld [vmem:[%s1 + $0x34] sm:$0xf]
    %v31 = vld [vmem:[%s1 + $0x38] sm:$0xf]
    %v32 = vld [vmem:[%s1 + $0x3c] sm:$0xf]
    %v33 = vld [vmem:[%s2] sm:$0x1]
    %v35 = vperm.slane %v33, 0
    %v39 = vunpack.c.l.b16 %v15
    %v40 = vunpack.c.l.b16 %v16
    %v41 = vpack.c.b16 %v40, %v39
    %v59 = vunpack.c.l.b16 %v17
    %v60 = vunpack.c.l.b16 %v18
    %v61 = vunpack.c.l.b16 %v19
    %v62 = vunpack.c.l.b16 %v20
    %v63 = vunpack.c.l.b16 %v21
    %v64 = vunpack.c.l.b16 %v22
    %v65 = vunpack.c.l.b16 %v23
    %v66 = vunpack.c.l.b16 %v24
    %v67 = vunpack.c.l.b16 %v25
    %v68 = vunpack.c.l.b16 %v26
    %v69 = vunpack.c.l.b16 %v27
    %v70 = vunpack.c.l.b16 %v28
    %v71 = vunpack.c.l.b16 %v29
    %v72 = vunpack.c.l.b16 %v30
    %v73 = vunpack.c.l.b16 %v31
    %v74 = vunpack.c.l.b16 %v32
    %v75 = vpack.c.b16 %v60, %v59
    %v76 = vpack.c.b16 %v62, %v61
    %v77 = vpack.c.b16 %v64, %v63
    %v78 = vpack.c.b16 %v66, %v65
    %v79 = vpack.c.b16 %v68, %v67
    %v80 = vpack.c.b16 %v70, %v69
    %v81 = vpack.c.b16 %v72, %v71
    %v82 = vpack.c.b16 %v74, %v73
    %91 = vmatpush.bf16.msra.mxu0 %v82
    %92 = vmatpush.bf16.msra.mxu0 %v81
    %93 = vmatpush.bf16.msra.mxu0 %v80
    %94 = vmatpush.bf16.msra.mxu0 %v79
    %95 = vmatpush.bf16.msra.mxu0 %v78
    %96 = vmatpush.bf16.msra.mxu0 %v77
    %97 = vmatpush.bf16.msra.mxu0 %v76
    %98 = vmatpush.bf16.msra.mxu0 %v75
    %99 = vmatmul.bf16.gmra.mxu0 %v41
    %v100 = vpop.f32.mrf.mxu0
    %v101 = vadd.f32 %v35, %v100
    %v102 = vpop.f32.mrf.mxu0
    %v103 = vadd.f32 %v35, %v102
    %104 = vdwg.mxu0
    %105 = vst [vmem:[#allocation2] sm:$0xff] %v101
    %106 = vst [vmem:[#allocation2 + $0x8] sm:$0xff] %v103
    // Predicated region
    $region14: #{decoder_forward.3} parent=1 // pred_check
      _
    $region15: #{decoder_forward.3} parent=1 // pred_check_branch
      %108 = sbr.rel (0) target = $region17
    $region16: #{decoder_forward.3} parent=1 // pred_region
      %110 = vsyncadd [#allocation3], 0
      %s111 = sshll.u32 [#allocation2], 4
      %s112 = int_to_ptr.vmem [resolvable:$true] %s111
      %s113 = sshll.u32 %s3, 4
      %s114 = int_to_ptr.hbm [resolvable:$true] %s113
      %119 = dma.vmem_to_hbm [thread:$0]  %s112, 256, %s114, [#allocation3], 128, 128, 8
    $region17: #{decoder_forward.3} parent=1 // pred_fallthru
      _
    // Predicated region
    $region18: #{decoder_forward.3} parent=1 // pred_check
      _
    $region19: #{decoder_forward.3} parent=1 // pred_check_branch
      %121 = sbr.rel (0) target = $region21
    $region20: #{decoder_forward.3} parent=1 // pred_region
      %123 = dma.done [#allocation3], 256
    $region21: #{decoder_forward.3} parent=1 // pred_fallthru
      _
    %124 = vsyncpa [#allocation3], 1

// kernel: decoder_forward.2
$region0: #{decoder_forward.2}
  #allocation0 [shape = 'u32[]', space=smem, size = 0x4, offset = 0x4, fixed_abs, tag = 'smem constant byte address 0x4 - core index']
  #allocation1 [shape = 'u32[72,128]{1,0:T(1,128)}', space=vmem, size = 0x9000, scoped, tag = 'internal scratch']
  #allocation2 [shape = 'f32[16,128]{1,0:T(8,128)}', space=vmem, size = 0x2000, scoped, tag = 'scratch operand']
  #allocation3 [shape = 'f32[16,128]{1,0:T(8,128)}', space=vmem, size = 0x2000, scoped, tag = 'scratch operand']
  %s0 = inlined_call_operand.vmem [shape: f32[16,128], index: 0, kind: input, shape index: {}]
  %s1 = inlined_call_operand.hbm [shape: bf16[2,128,128], index: 1, kind: input, shape index: {}]
  %s2 = inlined_call_operand.vmem [shape: f32[2,1,128], index: 2, kind: input, shape index: {}]
  %s3 = inlined_call_operand.hbm [shape: bf16[2,128,128], index: 3, kind: input, shape index: {}]
  %s4 = inlined_call_operand.vmem [shape: f32[2,1,128], index: 4, kind: input, shape index: {}]
  %s5 = inlined_call_operand.vmem [shape: bf16[16,128], index: 5, kind: output, shape index: {}]
  %s6 = sld [smem:[#allocation0]]
  $region77: #{decoder_forward.2} parent=0
    _
  %s8 = ssub.s32 1, %s6
  %s9 = scalar_select 0, %s8, %s6
  $region1: #{decoder_forward.2} parent=0
    #allocation4 [shape = 'u8[65536]{0}', space=vmem, size = 0x10000, scoped, tag = 'input window, operand 1']
    #allocation5 [shape = 's32[2]{0}', space=sflag, size = 0x8, scoped, tag = 'scoped memory for decoder_forward.2']
    #allocation6 [shape = 'u8[65536]{0}', space=vmem, size = 0x10000, scoped, tag = 'input window, operand 3']
    #allocation7 [shape = 's32[2]{0}', space=sflag, size = 0x8, scoped, tag = 'scoped memory for decoder_forward.2']
    %10 = vsyncpa [#allocation5], 0
    %s11 = scalar_lea.sflag [#allocation5], 1
    %12 = vsyncpa %s11, 0
    %13 = vsyncpa [#allocation7], 0
    %s14 = scalar_lea.sflag [#allocation7], 1
    %15 = vsyncpa %s14, 0
    loop: start=0, step=1, limit=4
    $region2: #{decoder_forward.2} parent=1 // loop_pre_header
      _
    $region3: #{decoder_forward.2} parent=1 // loop_header
      %s17 = sphi 0, %s21
      %p18 = scmp.ge.s32.totalorder %s17, 4
      %s24 = sphi 0, %s43
      %s25 = sphi 0, %s39
      %s26 = sphi 0, %s35
      %s27 = sphi 0, %s24
      %s28 = sphi 0, %s25
      %s29 = sphi 0, %s26
      %s30 = sphi 0, %s27
      %s31 = sphi 0, %s28
      %s32 = sphi 0, %s29
      %s46 = sphi 0, %s48
      %s49 = sphi 0, %s46
      %s50 = sphi 0, %s49
      %s66 = sphi 0, %s50
      %s74 = sphi 0, %s76
      %s77 = sphi 0, %s74
      %s78 = sphi 0, %s77
      %s94 = sphi 0, %s78
      %s102 = sphi 0, %s104
      %s105 = sphi 0, %s102
      %s106 = sphi 0, %s105
      %s122 = sphi 0, %s106
      %s130 = sphi 0, %s132
      %s133 = sphi 0, %s130
      %s134 = sphi 0, %s133
      %s150 = sphi 0, %s134
      %s156 = sphi 0, %s158
      %s159 = sphi 0, %s156
      %s160 = sphi 0, %s159
      %s176 = sphi 0, %s160
      %s182 = sphi 0, %s184
      %s185 = sphi 0, %s182
      %s186 = sphi 0, %s185
      %s202 = sphi 0, %s186
    $region4: #{decoder_forward.2} parent=1 // loop_header_branch
      %20 = sbr.rel (%p18) target = $region8
    $region5: #{decoder_forward.2} parent=1 // loop_body
      %s22 = ssub.s32 %s17, 1
      %s23 = ssub.s32 %s17, 2
      %s33 = sadd.s32 1, %s26
      %p34 = scmp.ge.s32.totalorder %s33, 1
      %s35 = scalar_select %p34, 0, %s33
      %s36 = sadd.s32 1, %s25
      %s37 = scalar_select %p34, %s36, %s25
      %p38 = scmp.ge.s32.totalorder %s37, 2
      %s39 = scalar_select %p38, 0, %s37
      %s40 = sadd.s32 1, %s24
      %s41 = scalar_select %p38, %s40, %s24
      %p42 = scmp.ge.s32.totalorder %s41, 1
      %s43 = scalar_select %p42, 0, %s41
      %s44 = ssub.s32 %s24, %s43
      %p45 = scmp.eq.s32.totalorder %s44, 0
      %s47 = sadd.s32 %s46, 1
      %s48 = scalar_select %p45, %s46, %s47
      %p51 = pneg %p45
      %p52 = scmp.eq.s32.totalorder %s17, 1
      %p53 = por %p51, %p52
      %p54 = scmp.ne.s32.totalorder %s46, %s49
      %p55 = scmp.eq.s32.totalorder %s17, 0
      %p56 = por %p54, %p55
      %p57 = scmp.ne.s32.totalorder %s46, %s49
      %p58 = scmp.eq.s32.totalorder %s22, 1
      %p59 = por %p57, %p58
      %p60 = scmp.ne.s32.totalorder %s49, %s50
      %p61 = scmp.eq.s32.totalorder %s22, 0
      %p62 = por %p60, %p61
      %p63 = scmp.ne.s32.totalorder %s49, %s50
      %p64 = scmp.eq.s32.totalorder %s23, 1
      %p65 = por %p63, %p64
      %p67 = scmp.ne.s32.totalorder %s50, %s66
      %p68 = scmp.eq.s32.totalorder %s23, 0
      %p69 = por %p67, %p68
      %s70 = ssub.s32 %s25, %s39
      %s71 = ssub.s32 %s26, %s35
      %s72 = sor.u32 %s70, %s71
      %p73 = scmp.eq.s32.totalorder %s72, 0
      %s75 = sadd.s32 %s74, 1
      %s76 = scalar_select %p73, %s74, %s75
      %p79 = pneg %p73
      %p80 = scmp.eq.s32.totalorder %s17, 1
      %p81 = por %p79, %p80
      %p82 = scmp.ne.s32.totalorder %s74, %s77
      %p83 = scmp.eq.s32.totalorder %s17, 0
      %p84 = por %p82, %p83
      %p85 = scmp.ne.s32.totalorder %s74, %s77
      %p86 = scmp.eq.s32.totalorder %s22, 1
      %p87 = por %p85, %p86
      %p88 = scmp.ne.s32.totalorder %s77, %s78
      %p89 = scmp.eq.s32.totalorder %s22, 0
      %p90 = por %p88, %p89
      %p91 = scmp.ne.s32.totalorder %s77, %s78
      %p92 = scmp.eq.s32.totalorder %s23, 1
      %p93 = por %p91, %p92
      %p95 = scmp.ne.s32.totalorder %s78, %s94
      %p96 = scmp.eq.s32.totalorder %s23, 0
      %p97 = por %p95, %p96
      %s98 = ssub.s32 %s25, %s39
      %s99 = ssub.s32 %s26, %s35
      %s100 = sor.u32 %s98, %s99
      %p101 = scmp.eq.s32.totalorder %s100, 0
      %s103 = sadd.s32 %s102, 1
      %s104 = scalar_select %p101, %s102, %s103
      %p107 = pneg %p101
      %p108 = scmp.eq.s32.totalorder %s17, 1
      %p109 = por %p107, %p108
      %p110 = scmp.ne.s32.totalorder %s102, %s105
      %p111 = scmp.eq.s32.totalorder %s17, 0
      %p112 = por %p110, %p111
      %p113 = scmp.ne.s32.totalorder %s102, %s105
      %p114 = scmp.eq.s32.totalorder %s22, 1
      %p115 = por %p113, %p114
      %p116 = scmp.ne.s32.totalorder %s105, %s106
      %p117 = scmp.eq.s32.totalorder %s22, 0
      %p118 = por %p116, %p117
      %p119 = scmp.ne.s32.totalorder %s105, %s106
      %p120 = scmp.eq.s32.totalorder %s23, 1
      %p121 = por %p119, %p120
      %p123 = scmp.ne.s32.totalorder %s106, %s122
      %p124 = scmp.eq.s32.totalorder %s23, 0
      %p125 = por %p123, %p124
      %s126 = ssub.s32 %s25, %s39
      %s127 = ssub.s32 %s26, %s35
      %s128 = sor.u32 %s126, %s127
      %p129 = scmp.eq.s32.totalorder %s128, 0
      %s131 = sadd.s32 %s130, 1
      %s132 = scalar_select %p129, %s130, %s131
      %p135 = pneg %p129
      %p136 = scmp.eq.s32.totalorder %s17, 1
      %p137 = por %p135, %p136
      %p138 = scmp.ne.s32.totalorder %s130, %s133
      %p139 = scmp.eq.s32.totalorder %s17, 0
      %p140 = por %p138, %p139
      %p141 = scmp.ne.s32.totalorder %s130, %s133
      %p142 = scmp.eq.s32.totalorder %s22, 1
      %p143 = por %p141, %p142
      %p144 = scmp.ne.s32.totalorder %s133, %s134
      %p145 = scmp.eq.s32.totalorder %s22, 0
      %p146 = por %p144, %p145
      %p147 = scmp.ne.s32.totalorder %s133, %s134
      %p148 = scmp.eq.s32.totalorder %s23, 1
      %p149 = por %p147, %p148
      %p151 = scmp.ne.s32.totalorder %s134, %s150
      %p152 = scmp.eq.s32.totalorder %s23, 0
      %p153 = por %p151, %p152
      %s154 = ssub.s32 %s25, %s39
      %p155 = scmp.eq.s32.totalorder %s154, 0
      %s157 = sadd.s32 %s156, 1
      %s158 = scalar_select %p155, %s156, %s157
      %p161 = pneg %p155
      %p162 = scmp.eq.s32.totalorder %s17, 1
      %p163 = por %p161, %p162
      %p164 = scmp.ne.s32.totalorder %s156, %s159
      %p165 = scmp.eq.s32.totalorder %s17, 0
      %p166 = por %p164, %p165
      %p167 = scmp.ne.s32.totalorder %s156, %s159
      %p168 = scmp.eq.s32.totalorder %s22, 1
      %p169 = por %p167, %p168
      %p170 = scmp.ne.s32.totalorder %s159, %s160
      %p171 = scmp.eq.s32.totalorder %s22, 0
      %p172 = por %p170, %p171
      %p173 = scmp.ne.s32.totalorder %s159, %s160
      %p174 = scmp.eq.s32.totalorder %s23, 1
      %p175 = por %p173, %p174
      %p177 = scmp.ne.s32.totalorder %s160, %s176
      %p178 = scmp.eq.s32.totalorder %s23, 0
      %p179 = por %p177, %p178
      %s180 = ssub.s32 %s24, %s43
      %p181 = scmp.eq.s32.totalorder %s180, 0
      %s183 = sadd.s32 %s182, 1
      %s184 = scalar_select %p181, %s182, %s183
      %p187 = pneg %p181
      %p188 = scmp.eq.s32.totalorder %s17, 1
      %p189 = por %p187, %p188
      %p190 = scmp.ne.s32.totalorder %s182, %s185
      %p191 = scmp.eq.s32.totalorder %s17, 0
      %p192 = por %p190, %p191
      %p193 = scmp.ne.s32.totalorder %s182, %s185
      %p194 = scmp.eq.s32.totalorder %s22, 1
      %p195 = por %p193, %p194
      %p196 = scmp.ne.s32.totalorder %s185, %s186
      %p197 = scmp.eq.s32.totalorder %s22, 0
      %p198 = por %p196, %p197
      %p199 = scmp.ne.s32.totalorder %s185, %s186
      %p200 = scmp.eq.s32.totalorder %s23, 1
      %p201 = por %p199, %p200
      %p203 = scmp.ne.s32.totalorder %s186, %s202
      %p204 = scmp.eq.s32.totalorder %s23, 0
      %p205 = por %p203, %p204
      %p206 = scmp.le.s32.totalorder 1, %s17
      %p207 = scmp.lt.s32.totalorder %s17, 3
      %p208 = pnand %p206, %p207
      %p209 = pneg %p208
      // Predicated region
      $region9: #{decoder_forward.2} parent=5 // pred_check
        _
      $region10: #{decoder_forward.2} parent=5 // pred_check_branch
        %211 = sbr.rel (%p208) target = $region12
      $region11: #{decoder_forward.2} parent=5 // pred_region
        %s212 = ssub.s32 %s17, 1
        // Predicated region
        $region13: #{decoder_forward.2} parent=11 // pred_check
          %p213 = pneg %p62
        $region14: #{decoder_forward.2} parent=11 // pred_check_branch
          %215 = sbr.rel (%p213) target = $region16
        $region15: #{decoder_forward.2} parent=11 // pred_region
          %s216 = smul.u32 2, %s27
          %p217 = scmp.lt.s32.totalorder %s216, 1
          %s218 = scalar_select %p217, %s216, 1
          %s219 = smul.addr %s218, 8
          %s220 = scalar_lea.vmem %s0, %s219
          %s221 = smul.u32 2, %s27
        $region16: #{decoder_forward.2} parent=11 // pred_fallthru
          _
      $region12: #{decoder_forward.2} parent=5 // pred_fallthru
        _
      %p222 = scmp.lt.s32.totalorder %s17, 2
      // Predicated region
      $region17: #{decoder_forward.2} parent=5 // pred_check
        %p223 = pneg %p222
      $region18: #{decoder_forward.2} parent=5 // pred_check_branch
        %225 = sbr.rel (%p223) target = $region20
      $region19: #{decoder_forward.2} parent=5 // pred_region
        // Predicated region
        $region21: #{decoder_forward.2} parent=19 // pred_check
          %p226 = pneg %p84
        $region22: #{decoder_forward.2} parent=19 // pred_check_branch
          %228 = sbr.rel (%p226) target = $region24
        $region23: #{decoder_forward.2} parent=19 // pred_region
          %s229 = sand.u32 %s74, 1
          %s230 = scalar_lea.sflag [#allocation5], %s229
          %s231 = sand.u32 %s74, 1
          %s232 = smul.addr %s231, 64
          %s233 = scalar_lea.vmem [#allocation4], %s232
          %235 = vsyncadd %s230, 0
          %s236 = smul.addr %s25, 16
          %s237 = sadd.s32 %s26, %s236
          %s238 = smul.addr %s237, 4
          %s239 = scalar_lea.hbm %s1, %s238
          %s240 = sshll.u32 %s239, 4
          %s241 = int_to_ptr.hbm [resolvable:$true] %s240
          %s242 = sshll.u32 %s233, 4
          %s243 = int_to_ptr.vmem [resolvable:$true] %s242
          %248 = dma.hbm_to_vmem [thread:$0]  %s241, 1024, %s243, %s230, 64, 64, 4
        $region24: #{decoder_forward.2} parent=19 // pred_fallthru
          _
        // Predicated region
        $region25: #{decoder_forward.2} parent=19 // pred_check
          %p249 = pneg %p112
        $region26: #{decoder_forward.2} parent=19 // pred_check_branch
          %251 = sbr.rel (%p249) target = $region28
        $region27: #{decoder_forward.2} parent=19 // pred_region
          %p252 = scmp.lt.s32.totalorder %s25, 1
          %s253 = scalar_select %p252, %s25, 1
          %p254 = scmp.lt.s32.totalorder %s26, 0
          %s255 = scalar_select %p254, %s26, 0
          %s256 = sadd.s32 %s255, %s253
          %s257 = scalar_lea.vmem %s2, %s256
        $region28: #{decoder_forward.2} parent=19 // pred_fallthru
          _
        // Predicated region
        $region29: #{decoder_forward.2} parent=19 // pred_check
          %p258 = pneg %p140
        $region30: #{decoder_forward.2} parent=19 // pred_check_branch
          %260 = sbr.rel (%p258) target = $region32
        $region31: #{decoder_forward.2} parent=19 // pred_region
          %s261 = sand.u32 %s130, 1
          %s262 = scalar_lea.sflag [#allocation7], %s261
          %s263 = sand.u32 %s130, 1
          %s264 = smul.addr %s263, 64
          %s265 = scalar_lea.vmem [#allocation6], %s264
          %s266 = smul.u32 16, %s26
          %268 = vsyncadd %s262, 0
          %s269 = smul.addr %s25, 16
          %s270 = sadd.s32 %s266, %s269
          %s271 = smul.addr %s270, 4
          %s272 = scalar_lea.hbm %s3, %s271
          %s273 = sshll.u32 %s272, 4
          %s274 = int_to_ptr.hbm [resolvable:$true] %s273
          %s275 = sshll.u32 %s265, 4
          %s276 = int_to_ptr.vmem [resolvable:$true] %s275
          %281 = dma.hbm_to_vmem [thread:$0]  %s274, 1024, %s276, %s262, 64, 64, 4
        $region32: #{decoder_forward.2} parent=19 // pred_fallthru
          _
        // Predicated region
        $region33: #{decoder_forward.2} parent=19 // pred_check
          %p282 = pneg %p166
        $region34: #{decoder_forward.2} parent=19 // pred_check_branch
          %284 = sbr.rel (%p282) target = $region36
        $region35: #{decoder_forward.2} parent=19 // pred_region
          %p285 = scmp.lt.s32.totalorder %s25, 1
          %s286 = scalar_select %p285, %s25, 1
          %s287 = scalar_lea.vmem %s4, %s286
        $region36: #{decoder_forward.2} parent=19 // pred_fallthru
          _
      $region20: #{decoder_forward.2} parent=5 // pred_fallthru
        _
      %p288 = scmp.le.s32.totalorder 1, %s17
      %p289 = scmp.lt.s32.totalorder %s17, 3
      %p290 = pnand %p288, %p289
      %p291 = pneg %p290
      // Predicated region
      $region37: #{decoder_forward.2} parent=5 // pred_check
        _
      $region38: #{decoder_forward.2} parent=5 // pred_check_branch
        %293 = sbr.rel (%p290) target = $region40
      $region39: #{decoder_forward.2} parent=5 // pred_region
        %s294 = ssub.s32 %s17, 1
        %s295 = sand.u32 %s77, 1
        %s296 = scalar_lea.sflag [#allocation5], %s295
        %s297 = sand.u32 %s77, 1
        %s298 = smul.addr %s297, 64
        %s299 = scalar_lea.vmem [#allocation4], %s298
        // Predicated region
        $region41: #{decoder_forward.2} parent=39 // pred_check
          %p300 = pneg %p90
        $region42: #{decoder_forward.2} parent=39 // pred_check_branch
          %302 = sbr.rel (%p300) target = $region44
        $region43: #{decoder_forward.2} parent=39 // pred_region
          %304 = dma.done %s296, 1024
        $region44: #{decoder_forward.2} parent=39 // pred_fallthru
          _
        %s305 = sand.u32 %s133, 1
        %s306 = scalar_lea.sflag [#allocation7], %s305
        %s307 = sand.u32 %s133, 1
        %s308 = smul.addr %s307, 64
        %s309 = scalar_lea.vmem [#allocation6], %s308
        // Predicated region
        $region45: #{decoder_forward.2} parent=39 // pred_check
          %p310 = pneg %p146
        $region46: #{decoder_forward.2} parent=39 // pred_check_branch
          %312 = sbr.rel (%p310) target = $region48
        $region47: #{decoder_forward.2} parent=39 // pred_region
          %314 = dma.done %s306, 1024
        $region48: #{decoder_forward.2} parent=39 // pred_fallthru
          _
        %s315 = smul.u32 2, %s27
        %p316 = scmp.lt.s32.totalorder %s315, 1
        %s317 = scalar_select %p316, %s315, 1
        %s318 = smul.addr %s317, 8
        %s319 = scalar_lea.vmem %s0, %s318
        %p320 = pneg %p62
        %p321 = pneg %p59
        %s322 = sand.u32 %s77, 1
        %s323 = scalar_lea.sflag [#allocation5], %s322
        %s324 = sand.u32 %s77, 1
        %s325 = smul.addr %s324, 64
        %s326 = scalar_lea.vmem [#allocation4], %s325
        %p327 = pneg %p90
        %p328 = pneg %p87
        %p329 = scmp.lt.s32.totalorder %s28, 1
        %s330 = scalar_select %p329, %s28, 1
        %p331 = scmp.lt.s32.totalorder %s29, 0
        %s332 = scalar_select %p331, %s29, 0
        %s333 = sadd.s32 %s332, %s330
        %s334 = scalar_lea.vmem %s2, %s333
        %p335 = pneg %p118
        %p336 = pneg %p115
        %s337 = sand.u32 %s133, 1
        %s338 = scalar_lea.sflag [#allocation7], %s337
        %s339 = sand.u32 %s133, 1
        %s340 = smul.addr %s339, 64
        %s341 = scalar_lea.vmem [#allocation6], %s340
        %p342 = pneg %p146
        %p343 = pneg %p143
        %p344 = scmp.lt.s32.totalorder %s28, 1
        %s345 = scalar_select %p344, %s28, 1
        %s346 = scalar_lea.vmem %s4, %s345
        %p347 = pneg %p172
        %p348 = pneg %p169
        %p349 = pneg %p198
        %p350 = pneg %p195
        %s351 = smul.u32 2, %s27
        %p352 = scmp.lt.s32.totalorder %s351, 1
        %s353 = scalar_select %p352, %s351, 1
        %s354 = smul.addr %s353, 4
        %s355 = scalar_lea.vmem %s5, %s354
        %s356 = smul.u32 2, %s27
        %p357 = scmp.lt.s32.totalorder %s356, 1
        %s358 = scalar_select %p357, %s356, 1
        %s359 = smul.addr %s358, 8
        %s360 = scalar_lea.vmem %s0, %s359
        %s361 = smul.u32 2, %s27
        %p362 = scmp.lt.s32.totalorder %s28, 1
        %s363 = scalar_select %p362, %s28, 1
        %p364 = scmp.lt.s32.totalorder %s29, 0
        %s365 = scalar_select %p364, %s29, 0
        %s366 = sadd.s32 %s365, %s363
        %s367 = scalar_lea.vmem %s2, %s366
        %s368 = smul.u32 16, %s29
        %p369 = scmp.lt.s32.totalorder %s28, 1
        %s370 = scalar_select %p369, %s28, 1
        %s371 = scalar_lea.vmem %s4, %s370
        %s372 = smul.u32 2, %s27
        %p373 = scmp.lt.s32.totalorder %s372, 1
        %s374 = scalar_select %p373, %s372, 1
        %s375 = smul.addr %s374, 4
        %s376 = scalar_lea.vmem %s5, %s375
        %s377 = smul.u32 2, %s27
        %p378 = scmp.eq.s32.totalorder %s28, 0
        %p379 = scmp.eq.s32.totalorder %s29, 0
        %p380 = pnand %p378, %p379
        %p381 = pneg %p380
        // Predicated region
        $region49: #{decoder_forward.2} parent=39 // pred_check
          _
        $region50: #{decoder_forward.2} parent=39 // pred_check_branch
          %383 = sbr.rel (%p380) target = $region52
        $region51: #{decoder_forward.2} parent=39 // pred_region
          %v384 = vld [vmem:[%s360] sm:$0xff]
          %v385 = vld [vmem:[%s360 + $0x8] sm:$0xff]
          %386 = vst [vmem:[#allocation2] sm:$0xff] %v384
          %387 = vst [vmem:[#allocation2 + $0x8] sm:$0xff] %v385
        $region52: #{decoder_forward.2} parent=39 // pred_fallthru
          _
        // Predicated region
        $region53: #{decoder_forward.2} parent=39 // pred_check
          %p388 = pneg %p379
        $region54: #{decoder_forward.2} parent=39 // pred_check_branch
          %390 = sbr.rel (%p388) target = $region56
        $region55: #{decoder_forward.2} parent=39 // pred_region
          %391 = vst [vmem:[#allocation3] sm:$0xff] 0.0
          %392 = vst [vmem:[#allocation3 + $0x8] sm:$0xff] 0.0
        $region56: #{decoder_forward.2} parent=39 // pred_fallthru
          _
        %v393 = vld [vmem:[#allocation2] sm:$0xff]
        %v394 = vld [vmem:[#allocation2 + $0x8] sm:$0xff]
        %v395 = vpack.c.bf16 %v394, %v393
        %v396 = vld [vmem:[%s299] sm:$0xf]
        %v397 = vld [vmem:[%s299 + $0x4] sm:$0xf]
        %v398 = vld [vmem:[%s299 + $0x8] sm:$0xf]
        %v399 = vld [vmem:[%s299 + $0xc] sm:$0xf]
        %v400 = vld [vmem:[%s299 + $0x10] sm:$0xf]
        %v401 = vld [vmem:[%s299 + $0x14] sm:$0xf]
        %v402 = vld [vmem:[%s299 + $0x18] sm:$0xf]
        %v403 = vld [vmem:[%s299 + $0x1c] sm:$0xf]
        %v404 = vld [vmem:[%s299 + $0x20] sm:$0xf]
        %v405 = vld [vmem:[%s299 + $0x24] sm:$0xf]
        %v406 = vld [vmem:[%s299 + $0x28] sm:$0xf]
        %v407 = vld [vmem:[%s299 + $0x2c] sm:$0xf]
        %v408 = vld [vmem:[%s299 + $0x30] sm:$0xf]
        %v409 = vld [vmem:[%s299 + $0x34] sm:$0xf]
        %v410 = vld [vmem:[%s299 + $0x38] sm:$0xf]
        %v411 = vld [vmem:[%s299 + $0x3c] sm:$0xf]
        %v412 = vld [vmem:[%s367] sm:$0x1]
        %v414 = vperm.slane %v412, 0
        %v432 = vunpack.c.l.b16 %v396
        %v433 = vunpack.c.l.b16 %v397
        %v434 = vunpack.c.l.b16 %v398
        %v435 = vunpack.c.l.b16 %v399
        %v436 = vunpack.c.l.b16 %v400
        %v437 = vunpack.c.l.b16 %v401
        %v438 = vunpack.c.l.b16 %v402
        %v439 = vunpack.c.l.b16 %v403
        %v440 = vunpack.c.l.b16 %v404
        %v441 = vunpack.c.l.b16 %v405
        %v442 = vunpack.c.l.b16 %v406
        %v443 = vunpack.c.l.b16 %v407
        %v444 = vunpack.c.l.b16 %v408
        %v445 = vunpack.c.l.b16 %v409
        %v446 = vunpack.c.l.b16 %v410
        %v447 = vunpack.c.l.b16 %v411
        %v448 = vpack.c.b16 %v433, %v432
        %v449 = vpack.c.b16 %v435, %v434
        %v450 = vpack.c.b16 %v437, %v436
        %v451 = vpack.c.b16 %v439, %v438
        %v452 = vpack.c.b16 %v441, %v440
        %v453 = vpack.c.b16 %v443, %v442
        %v454 = vpack.c.b16 %v445, %v444
        %v455 = vpack.c.b16 %v447, %v446
        %464 = vmatpush.bf16.msra.mxu0 %v455
        %465 = vmatpush.bf16.msra.mxu0 %v454
        %466 = vmatpush.bf16.msra.mxu0 %v453
        %467 = vmatpush.bf16.msra.mxu0 %v452
        %468 = vmatpush.bf16.msra.mxu0 %v451
        %469 = vmatpush.bf16.msra.mxu0 %v450
        %470 = vmatpush.bf16.msra.mxu0 %v449
        %471 = vmatpush.bf16.msra.mxu0 %v448
        %472 = vmatmul.bf16.gmra.mxu0 %v395
        %v473 = vpop.f32.mrf.mxu0
        %v474 = vadd.f32 %v414, %v473
        %v475 = vpop.f32.mrf.mxu0
        %v476 = vadd.f32 %v414, %v475
        %477 = vdwg.mxu0
        %v478 = vmul.f32 %v474, 0.5
        %v479 = vmul.f32 %v476, 0.5
        %v480 = vmul.f32 %v474, 0.044715
        %v481 = vmul.f32 %v476, 0.044715
        %v482 = vmul.f32 %v480, %v474
        %v483 = vmul.f32 %v481, %v476
        %v484 = vmul.f32 %v482, %v474
        %v485 = vmul.f32 %v483, %v476
        %v486 = vadd.f32 %v474, %v484
        %v487 = vadd.f32 %v476, %v485
        %v488 = vmul.f32 %v486, 0.7978846
        %v489 = vmul.f32 %v487, 0.7978846
        %v490 = vtanh.pop %v488
        %v491 = vtanh.pop %v489
        %v492 = vadd.f32 %v490, 1.0
        %v493 = vadd.f32 %v491, 1.0
        %v494 = vmul.f32 %v478, %v492
        %v495 = vmul.f32 %v479, %v493
        %v496 = vld [vmem:[#allocation3] sm:$0xff]
        %v497 = vld [vmem:[#allocation3 + $0x8] sm:$0xff]
        %v498 = vpack.c.bf16 %v495, %v494
        %v499 = vld [vmem:[%s309] sm:$0xf]
        %v500 = vld [vmem:[%s309 + $0x4] sm:$0xf]
        %v501 = vld [vmem:[%s309 + $0x8] sm:$0xf]
        %v502 = vld [vmem:[%s309 + $0xc] sm:$0xf]
        %v503 = vld [vmem:[%s309 + $0x10] sm:$0xf]
        %v504 = vld [vmem:[%s309 + $0x14] sm:$0xf]
        %v505 = vld [vmem:[%s309 + $0x18] sm:$0xf]
        %v506 = vld [vmem:[%s309 + $0x1c] sm:$0xf]
        %v507 = vld [vmem:[%s309 + $0x20] sm:$0xf]
        %v508 = vld [vmem:[%s309 + $0x24] sm:$0xf]
        %v509 = vld [vmem:[%s309 + $0x28] sm:$0xf]
        %v510 = vld [vmem:[%s309 + $0x2c] sm:$0xf]
        %v511 = vld [vmem:[%s309 + $0x30] sm:$0xf]
        %v512 = vld [vmem:[%s309 + $0x34] sm:$0xf]
        %v513 = vld [vmem:[%s309 + $0x38] sm:$0xf]
        %v514 = vld [vmem:[%s309 + $0x3c] sm:$0xf]
        %v531 = vunpack.c.l.b16 %v499
        %v532 = vunpack.c.l.b16 %v500
        %v533 = vunpack.c.l.b16 %v501
        %v534 = vunpack.c.l.b16 %v502
        %v535 = vunpack.c.l.b16 %v503
        %v536 = vunpack.c.l.b16 %v504
        %v537 = vunpack.c.l.b16 %v505
        %v538 = vunpack.c.l.b16 %v506
        %v539 = vunpack.c.l.b16 %v507
        %v540 = vunpack.c.l.b16 %v508
        %v541 = vunpack.c.l.b16 %v509
        %v542 = vunpack.c.l.b16 %v510
        %v543 = vunpack.c.l.b16 %v511
        %v544 = vunpack.c.l.b16 %v512
        %v545 = vunpack.c.l.b16 %v513
        %v546 = vunpack.c.l.b16 %v514
        %v547 = vpack.c.b16 %v532, %v531
        %v548 = vpack.c.b16 %v534, %v533
        %v549 = vpack.c.b16 %v536, %v535
        %v550 = vpack.c.b16 %v538, %v537
        %v551 = vpack.c.b16 %v540, %v539
        %v552 = vpack.c.b16 %v542, %v541
        %v553 = vpack.c.b16 %v544, %v543
        %v554 = vpack.c.b16 %v546, %v545
        %563 = vmatpush.bf16.msra.mxu0 %v554
        %564 = vmatpush.bf16.msra.mxu0 %v553
        %565 = vmatpush.bf16.msra.mxu0 %v552
        %566 = vmatpush.bf16.msra.mxu0 %v551
        %567 = vmatpush.bf16.msra.mxu0 %v550
        %568 = vmatpush.bf16.msra.mxu0 %v549
        %569 = vmatpush.bf16.msra.mxu0 %v548
        %570 = vmatpush.bf16.msra.mxu0 %v547
        %571 = vmatmul.bf16.gmra.mxu0 %v498
        %v572 = vpop.f32.mrf.mxu0
        %v573 = vadd.f32 0.0, %v572
        %v574 = vpop.f32.mrf.mxu0
        %v575 = vadd.f32 0.0, %v574
        %576 = vdwg.mxu0
        %v577 = vadd.f32 %v496, %v573
        %v578 = vadd.f32 %v497, %v575
        %579 = vst [vmem:[#allocation3] sm:$0xff] %v577
        %580 = vst [vmem:[#allocation3 + $0x8] sm:$0xff] %v578
        // Predicated region
        $region57: #{decoder_forward.2} parent=39 // pred_check
          %p581 = pneg %p379
        $region58: #{decoder_forward.2} parent=39 // pred_check_branch
          %583 = sbr.rel (%p581) target = $region60
        $region59: #{decoder_forward.2} parent=39 // pred_region
          %v584 = vld [vmem:[#allocation2] sm:$0xff]
          %v585 = vld [vmem:[#allocation2 + $0x8] sm:$0xff]
          %v586 = vld [vmem:[#allocation3] sm:$0xff]
          %v587 = vld [vmem:[#allocation3 + $0x8] sm:$0xff]
          %v588 = vadd.f32 %v584, %v586
          %v589 = vadd.f32 %v585, %v587
          %v590 = vld [vmem:[%s371] sm:$0x1]
          %v592 = vperm.slane %v590, 0
          %v594 = vadd.f32 %v588, %v592
          %v595 = vadd.f32 %v589, %v592
          %596 = vst [vmem:[#allocation2] sm:$0xff] %v594
          %597 = vst [vmem:[#allocation2 + $0x8] sm:$0xff] %v595
        $region60: #{decoder_forward.2} parent=39 // pred_fallthru
          _
        %p598 = scmp.eq.s32.totalorder %s28, 1
        %p599 = pnand %p379, %p598
        %p600 = pneg %p599
        // Predicated region
        $region61: #{decoder_forward.2} parent=39 // pred_check
          _
        $region62: #{decoder_forward.2} parent=39 // pred_check_branch
          %602 = sbr.rel (%p599) target = $region64
        $region63: #{decoder_forward.2} parent=39 // pred_region
          %v603 = vld [vmem:[#allocation2] sm:$0xff]
          %v604 = vld [vmem:[#allocation2 + $0x8] sm:$0xff]
          %v605 = vpack.c.bf16 %v603, %v603
          %v606 = vpack.c.bf16 %v604, %v604
          %607 = vst [vmem:[%s376] sm:$0xf] %v605
          %608 = vst [vmem:[%s376 + $0x4] sm:$0xf] %v606
        $region64: #{decoder_forward.2} parent=39 // pred_fallthru
          _
        %s609 = smul.u32 2, %s27
        %p610 = scmp.lt.s32.totalorder %s609, 1
        %s611 = scalar_select %p610, %s609, 1
        %s612 = smul.addr %s611, 4
        %s613 = scalar_lea.vmem %s5, %s612
        // Predicated region
        $region65: #{decoder_forward.2} parent=39 // pred_check
          %p614 = pneg %p195
        $region66: #{decoder_forward.2} parent=39 // pred_check_branch
          %616 = sbr.rel (%p614) target = $region68
        $region67: #{decoder_forward.2} parent=39 // pred_region
          %s617 = smul.u32 2, %s27
        $region68: #{decoder_forward.2} parent=39 // pred_fallthru
          _
        // Predicated region
        $region69: #{decoder_forward.2} parent=39 // pred_check
          %p618 = pneg %p195
        $region70: #{decoder_forward.2} parent=39 // pred_check_branch
          %620 = sbr.rel (%p618) target = $region72
        $region71: #{decoder_forward.2} parent=39 // pred_region
          %s621 = smul.u32 2, %s27
          %p622 = scmp.lt.s32.totalorder %s621, 1
          %s623 = scalar_select %p622, %s621, 1
          %s624 = smul.addr %s623, 4
          %s625 = scalar_lea.vmem %s5, %s624
        $region72: #{decoder_forward.2} parent=39 // pred_fallthru
          _
      $region40: #{decoder_forward.2} parent=5 // pred_fallthru
        _
      %p626 = scmp.le.s32.totalorder 2, %s17
      // Predicated region
      $region73: #{decoder_forward.2} parent=5 // pred_check
        %p627 = pneg %p626
      $region74: #{decoder_forward.2} parent=5 // pred_check_branch
        %629 = sbr.rel (%p627) target = $region76
      $region75: #{decoder_forward.2} parent=5 // pred_region
        %s630 = ssub.s32 %s17, 2
      $region76: #{decoder_forward.2} parent=5 // pred_fallthru
        _
    $region6: #{decoder_forward.2} parent=1 // loop_footer
      %s21 = sadd.s32 1, %s17
    $region7: #{decoder_forward.2} parent=1 // loop_footer_branch
      %16 = sbr.rel target = $region3
    $region8: #{decoder_forward.2} parent=1 // loop_exit
      _
    %631 = vsyncpa [#allocation5], 1
    %s632 = scalar_lea.sflag [#allocation5], 1
    %633 = vsyncpa %s632, 1
    %634 = vsyncpa [#allocation7], 1
    %s635 = scalar_lea.sflag [#allocation7], 1
    %636 = vsyncpa %s635, 1

</llo_original>
